<compile_context>
chip_gen: v7x
topology: tpu7x:2x2x1
jax: 0.10.0
libtpu: 0.0.40
codegen_flags: <defaults>
</compile_context>

<pallas_src>
import functools

import jax
import jax.numpy as jnp
from jax.experimental import pallas as pl
from jax.experimental.pallas import tpu as pltpu

EPS = 1e-5
_B_TILE_BUDGET = 6 * 1024 * 1024      # target bytes for one streamed (tk, tn) B tile
_TN_MAX = 16384                       # lane-tile cap
_VMEM_LIMIT = 32 * 1024 * 1024        # explicit scoped-VMEM limit (safe on v5e/v6e/v7x)


def _round_up(x, m):
    return (x + m - 1) // m * m


def _largest_div_leq(n, cap):
    for d in range(min(n, max(1, cap)), 0, -1):
        if n % d == 0:
            return d
    return 1


def _pick_tk(K):
    """Multiple of 128 that divides K exactly if possible (K > 1024)."""
    for u in range(32, 3, -1):                  # tk in 4096 .. 512
        if K % (u * 128) == 0:
            return u * 128
    return 2048                                 # fallback: pad K up to mult of 2048


def _plan_kn(K, N, itemsize=2):
    """K/N tiling for act(A @ B + shift).  Returns (tk, Kp, k_steps, tn, Np)."""
    if K <= 1024:
        Kp = _round_up(K, 8)
        tk = Kp                                 # single reduction step
    else:
        tk = _pick_tk(K)
        Kp = _round_up(K, tk)
    k_steps = Kp // tk
    Np = _round_up(N, 128)
    nu = Np // 128
    cap_u = max(1, min(_TN_MAX, _B_TILE_BUDGET // (tk * itemsize)) // 128)
    tu = _largest_div_leq(nu, cap_u)
    if tu == nu and nu >= 2:
        # keep >= 2 lane blocks so the "parallel" j axis can split across both
        # TensorCores on dual-TC chips (v7x); near-free on single-TC chips.
        tu = _largest_div_leq(nu, nu // 2)
    return tk, Kp, k_steps, tu * 128, Np


# ----------------------------------------------------------------------------
# Pallas kernels: tiled GEMM with fused shift (+ optional ReLU) epilogue.
# shift broadcasts against the (tm, tn) tile: (tm, 1) per output row (convs)
# or (1, tn) per output column (Linears).
# ----------------------------------------------------------------------------
def _gemm_kernel_single(a_ref, b_ref, shift_ref, o_ref, *, relu):
    out = jnp.dot(a_ref[...], b_ref[...], preferred_element_type=jnp.float32)
    out = out + shift_ref[...]
    if relu:
        out = jnp.maximum(out, 0.0)
    o_ref[...] = out.astype(o_ref.dtype)


def _gemm_kernel_multi(a_ref, b_ref, shift_ref, o_ref, *, relu):
    # o_ref is f32 and its block index is constant over the k axis, so it stays
    # resident in VMEM across the reduction — no scratch accumulator needed.
    @pl.when(pl.program_id(2) == 0)
    def _():
        o_ref[...] = jnp.zeros_like(o_ref)

    o_ref[...] += jnp.dot(a_ref[...], b_ref[...],
                          preferred_element_type=jnp.float32)

    @pl.when(pl.program_id(2) == pl.num_programs(2) - 1)
    def _():
        out = o_ref[...] + shift_ref[...]
        if relu:
            out = jnp.maximum(out, 0.0)
        o_ref[...] = out


def _gemm_padded(a_p, b_p, shift_p, *, shift_axis, k_steps, tm, tk, tn,
                 relu, out_dtype):
    """act(a_p @ b_p + shift) on pre-padded operands.  Returns (Mp, Np)."""
    Mp, Kp = a_p.shape
    Kp2, Np = b_p.shape
    assert Kp == Kp2 and Kp == k_steps * tk
    assert Mp % tm == 0 and Np % tn == 0

    multi = k_steps > 1
    o_dtype = jnp.float32 if multi else out_dtype   # exact accumulation in o_ref

    if shift_axis == 0:
        shift_spec = pl.BlockSpec((tm, 1), lambda i, j, k: (i, 0))
    else:
        shift_spec = pl.BlockSpec((1, tn), lambda i, j, k: (0, j))

    b_kwargs = {}
    if k_steps >= 8:
        # deep-K weight streaming (fcE of the full model): extra pipeline depth
        b_kwargs["pipeline_mode"] = pl.Buffered(3)

    in_specs = [
        pl.BlockSpec((tm, tk), lambda i, j, k: (i, k)),
        pl.BlockSpec((tk, tn), lambda i, j, k: (k, j), **b_kwargs),
        shift_spec,
    ]
    out_spec = pl.BlockSpec((tm, tn), lambda i, j, k: (i, j))
    grid = (Mp // tm, Np // tn, k_steps)

    kernel = functools.partial(
        _gemm_kernel_multi if multi else _gemm_kernel_single, relu=relu)

    out = pl.pallas_call(
        kernel,
        out_shape=jax.ShapeDtypeStruct((Mp, Np), o_dtype),
        grid_spec=pltpu.PrefetchScalarGridSpec(
            num_scalar_prefetch=0,
            grid=grid,
            in_specs=in_specs,
            out_specs=out_spec,
        ),
        compiler_params=pltpu.CompilerParams(
            dimension_semantics=("parallel", "parallel", "arbitrary"),
            vmem_limit_bytes=_VMEM_LIMIT),
    )(a_p, b_p, shift_p)
    if o_dtype != out_dtype:
        out = out.astype(out_dtype)
    return out


# ----------------------------------------------------------------------------
# One-time parameter preparation (BN folding, weight relayout, bf16 cast, pad)
# ----------------------------------------------------------------------------
def _bn_scale_shift(bias, bn, oc):
    """Fold conv bias + eval-mode BatchNorm into per-channel (scale, shift)."""
    if bn is None:
        return jnp.ones((oc,), jnp.float32), bias.astype(jnp.float32)
    gamma, beta, mean, var = bn
    scale = gamma / jnp.sqrt(var + EPS)
    shift = (bias - mean) * scale + beta
    return scale, shift


def _prep_conv(w, b, bn):
    """Conv2d(k=4,s=2,p=1): A matrix (OC, 16*IC) with BN folded, padded + bf16."""
    OC, IC = w.shape[0], w.shape[1]
    scale, shift = _bn_scale_shift(b, bn, OC)
    wmat = jnp.transpose(w, (0, 2, 3, 1)).reshape(OC, 16 * IC) * scale[:, None]
    M, K = OC, 16 * IC
    Mp, Kp = _round_up(M, 8), _round_up(K, 8)
    a_p = jnp.pad(wmat, ((0, Mp - M), (0, Kp - K))).astype(jnp.bfloat16)
    shift_p = jnp.pad(shift.astype(jnp.float32), (0, Mp - M)).reshape(Mp, 1)
    return {"a": a_p, "shift": shift_p}


# Output parity r -> 4-tap kernel indices used, ordered by padded-input offset.
# (1-D, k=4, s=2, p=1): y[2a + r] = sum_dp xpad[a + r + dp] * w[tap_r[dp]]
_SUBPIX_TAPS = ((3, 1), (2, 0))


def _prep_deconv(w, b, bn):
    """ConvTranspose2d(k=4,s=2,p=1): single stacked sub-pixel A matrix
    (4*OC, 9*IC) — one row block per output parity, shared 9-offset im2col."""
    IC, OC = w.shape[0], w.shape[1]
    scale, shift = _bn_scale_shift(b, bn, OC)
    parity_blocks = []
    for ri in (0, 1):
        for rj in (0, 1):
            col_blocks = []
            for oi in range(3):
                for oj in range(3):
                    dp, dq = oi - ri, oj - rj
                    if dp in (0, 1) and dq in (0, 1):
                        kh = _SUBPIX_TAPS[ri][dp]
                        kw = _SUBPIX_TAPS[rj][dq]
                        blk = jnp.transpose(w[:, :, kh, kw])     # (OC, IC)
                    else:
                        blk = jnp.zeros((OC, IC), w.dtype)
                    col_blocks.append(blk)
            parity_blocks.append(jnp.concatenate(col_blocks, axis=1))  # (OC, 9*IC)
    wstack = jnp.concatenate(parity_blocks, axis=0)                    # (4*OC, 9*IC)
    wstack = wstack * jnp.tile(scale, 4)[:, None]
    shift4 = jnp.tile(shift, 4)
    M, K = 4 * OC, 9 * IC
    Mp, Kp = _round_up(M, 8), _round_up(K, 8)
    a_p = jnp.pad(wstack, ((0, Mp - M), (0, Kp - K))).astype(jnp.bfloat16)
    shift_p = jnp.pad(shift4.astype(jnp.float32), (0, Mp - M)).reshape(Mp, 1)
    return {"a": a_p, "shift": shift_p}


def _prep_linear(w, b):
    """PyTorch Linear weight (N_out, K_in) -> bf16 B matrix (Kp, Np) + shift."""
    N, K = w.shape
    tk, Kp, k_steps, tn, Np = _plan_kn(K, N, 2)
    del tk, k_steps, tn
    b_mat = jnp.pad(jnp.transpose(w), ((0, Kp - K), (0, Np - N))).astype(jnp.bfloat16)
    shift_p = jnp.pad(b.astype(jnp.float32), (0, Np - N)).reshape(1, Np)
    return {"b": b_mat, "shift": shift_p}


def prepare_params(p):
    """One-time prep: fold layouts / BN / casts so the forward streams each
    weight exactly once (the 2x FC weight relayout was the dominant HBM cost)."""
    pp = {}
    pp["e1"] = _prep_conv(p["e1_w"], p["e1_b"], p["bn1"])
    pp["e2"] = _prep_conv(p["e2_w"], p["e2_b"], p["bn2"])
    pp["e3"] = _prep_conv(p["e3_w"], p["e3_b"], p["bn3"])
    pp["e4"] = _prep_conv(p["e4_w"], p["e4_b"], p["bn4"])
    pp["fcE"] = _prep_linear(p["fcE_w"], p["fcE_b"])
    pp["fcD"] = _prep_linear(p["fcD_w"], p["fcD_b"])
    pp["d1"] = _prep_deconv(p["d1_w"], p["d1_b"], p["dbn1"])
    pp["d2"] = _prep_deconv(p["d2_w"], p["d2_b"], p["dbn2"])
    pp["d3"] = _prep_deconv(p["d3_w"], p["d3_b"], p["dbn3"])
    pp["d4"] = _prep_deconv(p["d4_w"], p["d4_b"], None)
    return pp


# ----------------------------------------------------------------------------
# Layers (lane-dense GEMMs; activations stay in channels-first CNHW bf16)
# ----------------------------------------------------------------------------
def conv2d_bn_relu(x, layer, *, oc, relu=True, out_dtype=jnp.bfloat16):
    """Conv2d(k=4,s=2,p=1) + eval-BN + ReLU as one GEMM.  x: CNHW (IC,Nb,H,W)."""
    x = x.astype(jnp.bfloat16)
    IC, Nb, H, W = x.shape
    OH, OW = (H + 2 - 4) // 2 + 1, (W + 2 - 4) // 2 + 1
    K, N = 16 * IC, Nb * OH * OW
    xp = jnp.pad(x, ((0, 0), (0, 0), (1, 1), (1, 1)))
    rows = [xp[:, :, kh:kh + 2 * OH - 1:2, kw:kw + 2 * OW - 1:2].reshape(IC, N)
            for kh in range(4) for kw in range(4)]
    xt = jnp.concatenate(rows, axis=0)                       # (16*IC, N) bf16
    tk, Kp, k_steps, tn, Np = _plan_kn(K, N, 2)
    assert k_steps == 1 and Kp == K
    if Np != N:
        xt = jnp.pad(xt, ((0, 0), (0, Np - N)))
    a_p, shift_p = layer["a"], layer["shift"]
    assert a_p.shape == (_round_up(oc, 8), Kp), (a_p.shape, oc, Kp)
    out = _gemm_padded(a_p, xt, shift_p, shift_axis=0, k_steps=1,
                       tm=a_p.shape[0], tk=tk, tn=tn, relu=relu,
                       out_dtype=out_dtype)
    out = out[:oc, :N]
    return out.reshape(oc, Nb, OH, OW)


def deconv_bn_relu(x, layer, *, oc, relu=True, out_dtype=jnp.bfloat16):
    """ConvTranspose2d(k=4,s=2,p=1) + eval-BN + ReLU as one stacked sub-pixel
    GEMM (all 4 output parities in one launch).  x: CNHW (IC,Nb,H,W)."""
    x = x.astype(jnp.bfloat16)
    IC, Nb, H, W = x.shape
    K, N = 9 * IC, Nb * H * W
    xp = jnp.pad(x, ((0, 0), (0, 0), (1, 1), (1, 1)))        # (IC, Nb, H+2, W+2)
    rows = [xp[:, :, oi:oi + H, oj:oj + W].reshape(IC, N)
            for oi in range(3) for oj in range(3)]
    xt = jnp.concatenate(rows, axis=0)                       # (9*IC, N) bf16
    tk, Kp, k_steps, tn, Np = _plan_kn(K, N, 2)
    assert k_steps == 1
    if (Kp, Np) != (K, N):
        xt = jnp.pad(xt, ((0, Kp - K), (0, Np - N)))
    a_p, shift_p = layer["a"], layer["shift"]
    assert a_p.shape == (_round_up(4 * oc, 8), Kp), (a_p.shape, oc, Kp)
    out = _gemm_padded(a_p, xt, shift_p, shift_axis=0, k_steps=1,
                       tm=a_p.shape[0], tk=tk, tn=tn, relu=relu,
                       out_dtype=out_dtype)
    out = out[:4 * oc, :N]
    y = out.reshape(2, 2, oc, Nb, H, W)                      # (ri, rj, oc, n, h, w)
    y = jnp.transpose(y, (2, 3, 4, 0, 5, 1)).reshape(oc, Nb, 2 * H, 2 * W)
    return y


def linear(x, layer, *, n, relu=False, out_dtype=jnp.float32):
    """PyTorch Linear y = x @ w.T + b using the pre-materialized bf16 weight."""
    M, K = x.shape
    tk, Kp, k_steps, tn, Np = _plan_kn(K, n, 2)
    b_p, shift_p = layer["b"], layer["shift"]
    assert b_p.shape == (Kp, Np), (b_p.shape, Kp, Np)
    tm = min(_round_up(M, 8), 256)
    Mp = _round_up(M, tm)
    a_p = jnp.pad(x, ((0, Mp - M), (0, Kp - K))).astype(jnp.bfloat16)
    out = _gemm_padded(a_p, b_p, shift_p, shift_axis=1, k_steps=k_steps,
                       tm=tm, tk=tk, tn=tn, relu=relu, out_dtype=out_dtype)
    if (Mp, Np) != (M, n):
        out = out[:M, :n]
    return out


# ----------------------------------------------------------------------------
# CAE forward (matches the PyTorch module in eval mode)
# ----------------------------------------------------------------------------
def cae_forward(x, pp, *, code_dim):
    """x: (Nb, 1, H, W) NCHW float32 -> (x_rec NCHW f32, code f32)."""
    Nb = x.shape[0]
    h = jnp.transpose(x.astype(jnp.bfloat16), (1, 0, 2, 3))  # CNHW (C=1: cheap)
    h = conv2d_bn_relu(h, pp["e1"], oc=4)                    # Dropout = identity (eval)
    h = conv2d_bn_relu(h, pp["e2"], oc=8)
    h = conv2d_bn_relu(h, pp["e3"], oc=16)
    h = conv2d_bn_relu(h, pp["e4"], oc=32)
    C4, _, H4, W4 = h.shape
    feat = C4 * H4 * W4

    hf = jnp.transpose(h, (1, 0, 2, 3)).reshape(Nb, feat)    # PyTorch .view order
    code = linear(hf, pp["fcE"], n=code_dim, relu=False, out_dtype=jnp.float32)

    y = linear(code, pp["fcD"], n=feat, relu=True, out_dtype=jnp.bfloat16)
    y = jnp.transpose(y.reshape(Nb, C4, H4, W4), (1, 0, 2, 3))      # back to CNHW
    y = deconv_bn_relu(y, pp["d1"], oc=16)
    y = deconv_bn_relu(y, pp["d2"], oc=8)
    y = deconv_bn_relu(y, pp["d3"], oc=4)
    y = deconv_bn_relu(y, pp["d4"], oc=1, relu=False, out_dtype=jnp.float32)
    x_rec = jnp.transpose(y, (1, 0, 2, 3))                   # (Nb, 1, H, W) f32
    return x_rec, code


def init_params(key, *, h4, w4, code_dim):
    """Same architecture as the PyTorch CAE; FC sizes follow the encoder output
    32*h4*w4.  (Original model: h4=16, w4=125 -> 64000, code_dim=1000.)"""
    keys = iter(jax.random.split(key, 24))

    def conv_w(oc, ic):
        return jax.random.normal(next(keys), (oc, ic, 4, 4), jnp.float32) / jnp.sqrt(ic * 16.0)

    def convT_w(ic, oc):
        return jax.random.normal(next(keys), (ic, oc, 4, 4), jnp.float32) / jnp.sqrt(ic * 16.0)

    def bias(n):
        return jax.random.normal(next(keys), (n,), jnp.float32) * 0.01

    def bn(c):  # PyTorch BatchNorm2d defaults: gamma=1, beta=0, mean=0, var=1
        return (jnp.ones((c,), jnp.float32), jnp.zeros((c,), jnp.float32),
                jnp.zeros((c,), jnp.float32), jnp.ones((c,), jnp.float32))

    feat = 32 * h4 * w4
    p = {}
    p["e1_w"], p["e1_b"], p["bn1"] = conv_w(4, 1), bias(4), bn(4)
    p["e2_w"], p["e2_b"], p["bn2"] = conv_w(8, 4), bias(8), bn(8)
    p["e3_w"], p["e3_b"], p["bn3"] = conv_w(16, 8), bias(16), bn(16)
    p["e4_w"], p["e4_b"], p["bn4"] = conv_w(32, 16), bias(32), bn(32)
    p["fcE_w"] = jax.random.normal(next(keys), (code_dim, feat), jnp.float32) / jnp.sqrt(float(feat))
    p["fcE_b"] = bias(code_dim)
    p["fcD_w"] = jax.random.normal(next(keys), (feat, code_dim), jnp.float32) / jnp.sqrt(float(code_dim))
    p["fcD_b"] = bias(feat)
    p["d1_w"], p["d1_b"], p["dbn1"] = convT_w(32, 16), bias(16), bn(16)
    p["d2_w"], p["d2_b"], p["dbn2"] = convT_w(16, 8), bias(8), bn(8)
    p["d3_w"], p["d3_b"], p["dbn3"] = convT_w(8, 4), bias(4), bn(4)
    p["d4_w"], p["d4_b"] = convT_w(4, 1), bias(1)
    return p


def _self_check(key):
    """Cross-check the Pallas conv / stacked sub-pixel deconv blocks against
    XLA references (bf16-operand tolerance; catches structural/index bugs)."""
    k1, k2, k3, k4 = jax.random.split(key, 4)
    ic, oc, nb, h, w = 4, 5, 2, 8, 16
    x = jax.random.normal(k1, (nb, ic, h, w), jnp.float32)
    wc = jax.random.normal(k2, (oc, ic, 4, 4), jnp.float32) * 0.1
    wt = jax.random.normal(k3, (ic, oc, 4, 4), jnp.float32) * 0.1
    b = jax.random.normal(k4, (oc,), jnp.float32) * 0.1
    x_c = jnp.transpose(x, (1, 0, 2, 3))
    dn = ("NCHW", "OIHW", "NCHW")
    hi = jax.lax.Precision.HIGHEST

    conv_layer = _prep_conv(wc, b, None)
    got = jnp.transpose(conv2d_bn_relu(x_c, conv_layer, oc=oc, relu=True,
                                       out_dtype=jnp.float32), (1, 0, 2, 3))
    ref = jax.lax.conv_general_dilated(x, wc, (2, 2), [(1, 1), (1, 1)],
                                       dimension_numbers=dn, precision=hi)
    ref = jnp.maximum(ref + b[None, :, None, None], 0.0)
    assert bool(jnp.allclose(got, ref, atol=2e-2, rtol=2e-2)), "conv2d mismatch"

    dec_layer = _prep_deconv(wt, b, None)
    got = jnp.transpose(deconv_bn_relu(x_c, dec_layer, oc=oc, relu=False,
                                       out_dtype=jnp.float32), (1, 0, 2, 3))
    wt_flip = jnp.transpose(jnp.flip(wt, (2, 3)), (1, 0, 2, 3))
    ref = jax.lax.conv_general_dilated(x, wt_flip, (1, 1), [(2, 2), (2, 2)],
                                       lhs_dilation=(2, 2),
                                       dimension_numbers=dn, precision=hi)
    ref = ref + b[None, :, None, None]
    assert bool(jnp.allclose(got, ref, atol=2e-2, rtol=2e-2)), "conv_transpose2d mismatch"


if __name__ == "__main__":
    key = jax.random.PRNGKey(0)
    pkey, xkey, ckey = jax.random.split(key, 3)

    _self_check(ckey)

    # Small stand-in for the original (N,1,256,2000) input / 64000->1000
    # bottleneck: same architecture, spatial + FC sizes scaled down so the
    # check finishes quickly.
    Nb, H, W = 2, 64, 128
    code_dim = 128
    params = init_params(pkey, h4=H // 16, w4=W // 16, code_dim=code_dim)

    prepped = jax.jit(prepare_params)(params)     # one-time weight prep
    jax.block_until_ready(prepped)

    x = jax.random.normal(xkey, (Nb, 1, H, W), jnp.float32)
    fwd = jax.jit(functools.partial(cae_forward, code_dim=code_dim))
    x_rec, code = fwd(x, prepped)
    jax.block_until_ready((x_rec, code))

    assert x_rec.shape == (Nb, 1, H, W), x_rec.shape
    assert code.shape == (Nb, code_dim), code.shape
    assert x_rec.dtype == jnp.float32 and code.dtype == jnp.float32
    assert bool(jnp.all(jnp.isfinite(x_rec))) and bool(jnp.all(jnp.isfinite(code)))
    print("KERNEL_OK")
</pallas_src>

<mosaic_0001>
module attributes {stable_mosaic.version = 11 : i64} {
  func.func @_gemm_kernel_single(%arg0: i32, %arg1: i32, %arg2: i32, %arg3: memref<8x64xbf16, #tpu.memory_space<vmem>>, %arg4: memref<64x128xbf16, #tpu.memory_space<vmem>>, %arg5: memref<8x1xf32, #tpu.memory_space<vmem>>, %arg6: memref<8x128xf32, #tpu.memory_space<vmem>>) attributes {dimension_semantics = [#tpu.dimension_semantics<parallel>, #tpu.dimension_semantics<parallel>, #tpu.dimension_semantics<arbitrary>], iteration_bounds = array<i64: 1, 1, 1>, scalar_prefetch = 0 : i64, scratch_operands = 0 : i64, tpu.core_type = #tpu.core_type<tc>, window_params = [{transform_indices = @transform_0, window_bounds = array<i64: 8, 64>}, {transform_indices = @transform_1, window_bounds = array<i64: 64, 128>}, {transform_indices = @transform_2, window_bounds = array<i64: 8, 1>}, {transform_indices = @transform_3, window_bounds = array<i64: 8, 128>}]} {
    %c0 = arith.constant 0 : index
    %c0_0 = arith.constant 0 : index
    %0 = vector.load %arg3[%c0, %c0_0] : memref<8x64xbf16, #tpu.memory_space<vmem>>, vector<8x64xbf16>
    %c0_1 = arith.constant 0 : index
    %c0_2 = arith.constant 0 : index
    %1 = vector.load %arg4[%c0_1, %c0_2] : memref<64x128xbf16, #tpu.memory_space<vmem>>, vector<64x128xbf16>
    %cst = arith.constant dense<0.000000e+00> : vector<8x128xf32>
    %2 = tpu.matmul %0, %1, %cst {dimension_numbers = #tpu.dot_dimension_numbers<[1], [0], [0], [1], [0, 0, 1, 1], [], []>} : vector<8x64xbf16>, vector<64x128xbf16>, vector<8x128xf32> -> vector<8x128xf32>
    %c0_3 = arith.constant 0 : index
    %c0_4 = arith.constant 0 : index
    %3 = vector.load %arg5[%c0_3, %c0_4] : memref<8x1xf32, #tpu.memory_space<vmem>>, vector<8x1xf32>
    %4 = vector.broadcast %3 : vector<8x1xf32> to vector<8x128xf32>
    %5 = arith.addf %2, %4 : vector<8x128xf32>
    %cst_5 = arith.constant 0.000000e+00 : f32
    %6 = vector.broadcast %cst_5 : f32 to vector<8x128xf32>
    %7 = arith.maximumf %5, %6 : vector<8x128xf32>
    %c0_6 = arith.constant 0 : index
    %c0_7 = arith.constant 0 : index
    %8 = vector.load %arg6[%c0_6, %c0_7] : memref<8x128xf32, #tpu.memory_space<vmem>>, vector<8x128xf32>
    tpu.vector_store %arg6[%c0_6, %c0_7], %7 {strides = array<i32>} : memref<8x128xf32, #tpu.memory_space<vmem>>, vector<8x128xf32>,
    return
  }
  func.func @transform_0(%arg0: i32, %arg1: i32, %arg2: i32) -> (i32, i32) {
    %c0_i32 = arith.constant 0 : i32
    return %arg0, %arg2 : i32, i32
  }
  func.func @transform_1(%arg0: i32, %arg1: i32, %arg2: i32) -> (i32, i32) {
    %c0_i32 = arith.constant 0 : i32
    return %arg2, %arg1 : i32, i32
  }
  func.func @transform_2(%arg0: i32, %arg1: i32, %arg2: i32) -> (i32, i32) {
    %c0_i32 = arith.constant 0 : i32
    %c0_i32_0 = arith.constant 0 : i32
    return %arg0, %c0_i32 : i32, i32
  }
  func.func @transform_3(%arg0: i32, %arg1: i32, %arg2: i32) -> (i32, i32) {
    %c0_i32 = arith.constant 0 : i32
    return %arg0, %arg1 : i32, i32
  }
}

</mosaic_0001>

<llo_original>
// kernel: tpu_custom_call.1
$region0: #{tpu_custom_call.1}
  #allocation0 [shape = 'u32[]', space=smem, size = 0x4, offset = 0x4, fixed_abs, tag = 'smem constant byte address 0x4 - core index']
  #allocation1 [shape = 'u32[144,128]{1,0:T(1,128)}', space=vmem, size = 0x12000, scoped, tag = 'internal scratch']
  %s0 = inlined_call_operand.vmem [shape: bf16[8,64], index: 0, kind: input, shape index: {}]
  %s1 = inlined_call_operand.hbm [shape: bf16[64,128], index: 1, kind: input, shape index: {}]
  %s2 = inlined_call_operand.vmem [shape: f32[8,1], index: 2, kind: input, shape index: {}]
  %s3 = inlined_call_operand.hbm [shape: f32[8,128], index: 3, kind: output, shape index: {}]
  %s4 = sld [smem:[#allocation0]]
  $region26: #{tpu_custom_call.1} parent=0
    _
  %s6 = ssub.s32 1, %s4
  %s7 = scalar_select 0, %s6, %s4
  $region1: #{tpu_custom_call.1} parent=0
    #allocation2 [shape = 'u8[16384]{0}', space=vmem, size = 0x4000, scoped, tag = 'input window, operand 1, single buffered']
    #allocation3 [shape = 's32[1]{0}', space=sflag, size = 0x4, scoped, tag = 'scoped memory for tpu_custom_call.1']
    #allocation4 [shape = 's32[1]{0}', space=sflag, size = 0x4, scoped, tag = 'scoped memory for tpu_custom_call.1']
    #allocation5 [shape = 'u8[4096]{0}', space=vmem, size = 0x1000, scoped, tag = 'output window, operand 0, single buffered']
    %8 = vsyncpa [#allocation3], 0
    %9 = vsyncpa [#allocation4], 0
    // Predicated region
    $region2: #{tpu_custom_call.1} parent=1 // pred_check
      _
    $region3: #{tpu_custom_call.1} parent=1 // pred_check_branch
      %11 = sbr.rel (0) target = $region5
    $region4: #{tpu_custom_call.1} parent=1 // pred_region
      _
    $region5: #{tpu_custom_call.1} parent=1 // pred_fallthru
      _
    // Predicated region
    $region6: #{tpu_custom_call.1} parent=1 // pred_check
      _
    $region7: #{tpu_custom_call.1} parent=1 // pred_check_branch
      %13 = sbr.rel (0) target = $region9
    $region8: #{tpu_custom_call.1} parent=1 // pred_region
      %s15 = ssub.s32 512, 512
      %16 = vsyncadd [#allocation3], %s15
      %s17 = sshll.u32 [#allocation2], 4
      %s18 = int_to_ptr.vmem [resolvable:$true] %s17
      %23 = dma.hbm_to_vmem [thread:$0]  %s1, 512, %s18, [#allocation3], 64, 64, 4
    $region9: #{tpu_custom_call.1} parent=1 // pred_fallthru
      _
    // Predicated region
    $region10: #{tpu_custom_call.1} parent=1 // pred_check
      _
    $region11: #{tpu_custom_call.1} parent=1 // pred_check_branch
      %25 = sbr.rel (0) target = $region13
    $region12: #{tpu_custom_call.1} parent=1 // pred_region
      _
    $region13: #{tpu_custom_call.1} parent=1 // pred_fallthru
      _
    // Predicated region
    $region14: #{tpu_custom_call.1} parent=1 // pred_check
      _
    $region15: #{tpu_custom_call.1} parent=1 // pred_check_branch
      %27 = sbr.rel (0) target = $region17
    $region16: #{tpu_custom_call.1} parent=1 // pred_region
      %28 = dma.done [#allocation3], 512
    $region17: #{tpu_custom_call.1} parent=1 // pred_fallthru
      _
    %v30 = vld [vmem:[%s0] sm:$0xf]
    %v31 = vld [vmem:[#allocation2] sm:$0xf]
    %v32 = vld [vmem:[#allocation2 + $0x4] sm:$0xf]
    %v33 = vld [vmem:[#allocation2 + $0x8] sm:$0xf]
    %v34 = vld [vmem:[#allocation2 + $0xc] sm:$0xf]
    %v35 = vld [vmem:[#allocation2 + $0x10] sm:$0xf]
    %v36 = vld [vmem:[#allocation2 + $0x14] sm:$0xf]
    %v37 = vld [vmem:[#allocation2 + $0x18] sm:$0xf]
    %v38 = vld [vmem:[#allocation2 + $0x1c] sm:$0xf]
    %v39 = vld [vmem:[%s2] sm:$0xff]
    %41 = vset.pattern.permute.xlu0 0
    %42 = vperm.xlu0 %41, %v39
    %v43 = vpop.permute.xlu0 %42
    %v53 = vunpack.c.l.b16 %v31
    %v54 = vunpack.c.l.b16 %v32
    %v55 = vunpack.c.l.b16 %v33
    %v56 = vunpack.c.l.b16 %v34
    %v57 = vunpack.c.l.b16 %v35
    %v58 = vunpack.c.l.b16 %v36
    %v59 = vunpack.c.l.b16 %v37
    %v60 = vunpack.c.l.b16 %v38
    %v61 = vpack.c.b16 %v54, %v53
    %v62 = vpack.c.b16 %v56, %v55
    %v63 = vpack.c.b16 %v58, %v57
    %v64 = vpack.c.b16 %v60, %v59
    %vm69 = vcmask 523264
    %v71 = vsel %vm69, %v30, 0
    %73 = vmatprep.subr.bf16.mxu0 0
    %74 = vmatpush1.bf16.msra.mxu0 %v61
    %75 = vmatprep.subr.bf16.mxu0 0
    %76 = vmatpush1.bf16.msra.mxu0 %v62
    %77 = vmatprep.subr.bf16.mxu0 0
    %78 = vmatpush1.bf16.msra.mxu0 %v63
    %79 = vmatprep.subr.bf16.mxu0 0
    %80 = vmatpush1.bf16.msra.mxu0 %v64
    %81 = vmatprep.subr.bf16.mxu0 0
    %82 = vmatpush1.bf16.msra.mxu0 0
    %83 = vmatprep.subr.bf16.mxu0 0
    %84 = vmatpush1.bf16.msra.mxu0 0
    %85 = vmatprep.subr.bf16.mxu0 0
    %86 = vmatpush1.bf16.msra.mxu0 0
    %87 = vmatprep.subr.bf16.mxu0 0
    %88 = vmatpush1.bf16.msra.mxu0 0
    %89 = vmatprep.subr.bf16.mxu0 0
    %90 = vmatpush1.bf16.msra.mxu0 0
    %91 = vmatprep.subr.bf16.mxu0 0
    %92 = vmatpush1.bf16.msra.mxu0 0
    %93 = vmatprep.subr.bf16.mxu0 0
    %94 = vmatpush1.bf16.msra.mxu0 0
    %95 = vmatprep.subr.bf16.mxu0 0
    %96 = vmatpush1.bf16.msra.mxu0 0
    %97 = vmatprep.subr.bf16.mxu0 0
    %98 = vmatpush1.bf16.msra.mxu0 0
    %99 = vmatprep.subr.bf16.mxu0 0
    %100 = vmatpush1.bf16.msra.mxu0 0
    %101 = vmatprep.subr.bf16.mxu0 0
    %102 = vmatpush1.bf16.msra.mxu0 0
    %103 = vmatprep.subr.bf16.mxu0 0
    %104 = vmatpush1.bf16.msra.mxu0 0
    %105 = vmatprep.mubr.bf16.mxu0 0
    %106 = vmatmul.mubr.bf16.gmra.mrb[0].mxu0 %v71
    %v107 = vpop.f32.mrb[0].mxu0
    %v108 = vadd.f32 %v43, %v107
    %v109 = vpop.f32.mrb[0].mxu0
    %v110 = vpop.f32.mrb[0].mxu0
    %v111 = vpop.f32.mrb[0].mxu0
    %112 = vdwg.mxu0
    %v113 = vmax.f32 %v108, 0.0
    %114 = vst [vmem:[#allocation5] sm:$0xff] %v113
    // Predicated region
    $region18: #{tpu_custom_call.1} parent=1 // pred_check
      _
    $region19: #{tpu_custom_call.1} parent=1 // pred_check_branch
      %116 = sbr.rel (0) target = $region21
    $region20: #{tpu_custom_call.1} parent=1 // pred_region
      %s118 = ssub.s32 128, 128
      %119 = vsyncadd [#allocation4], %s118
      %s121 = sshll.u32 [#allocation5], 4
      %s122 = int_to_ptr.vmem [resolvable:$true] %s121
      %124 = dma.vmem_to_hbm [thread:$0]  %s122, 128, %s3, [#allocation4]
    $region21: #{tpu_custom_call.1} parent=1 // pred_fallthru
      _
    // Predicated region
    $region22: #{tpu_custom_call.1} parent=1 // pred_check
      _
    $region23: #{tpu_custom_call.1} parent=1 // pred_check_branch
      %126 = sbr.rel (0) target = $region25
    $region24: #{tpu_custom_call.1} parent=1 // pred_region
      %127 = dma.done [#allocation4], 128
    $region25: #{tpu_custom_call.1} parent=1 // pred_fallthru
      _
    %128 = vsyncpa [#allocation3], 1
    %129 = vsyncpa [#allocation4], 1

</llo_original>
